<compile_context>
chip_gen: v5e
topology: v5e:2x2
jax: 0.10.0
libtpu: 0.0.40
codegen_flags: <defaults>
</compile_context>

<pallas_src>
import functools
import math

import jax
import jax.numpy as jnp
from jax.experimental import pallas as pl
from jax.experimental.pallas import tpu as pltpu


def dnet_kernel(x_ref, w1_ref, b1_ref, w2_ref, b2_ref, o_ref):
    # x_ref:  [tb, 784] f32   (batch tile, pipelined)
    # w1_ref: [784, 128] bf16 (resident), b1_ref: [1, 128] f32 (resident)
    # w2_ref: [1, 128]  f32   (resident), b2_ref: [1, 1]   f32 (SMEM scalar)
    # o_ref:  [1, tb//128, 128] f32 — lane-dense sigmoid probabilities
    tb = x_ref.shape[0]
    g = tb // 128

    # Layer 1 on the MXU: in-kernel f32->bf16 cast (x read from HBM once, as
    # f32), f32 accumulation.
    x_bf = x_ref[...].astype(jnp.bfloat16)
    h = jnp.dot(x_bf, w1_ref[...], preferred_element_type=jnp.float32)
    h = h + b1_ref[...]                      # broadcast bias over batch rows
    h = jnp.maximum(h, 0.2 * h)              # LeakyReLU(0.2)
    # TODO(synk): Dropout(0.3) is identity in eval mode; training-mode masking
    # (pltpu.prng_random_bits + 1/(1-p) scaling) intentionally not applied.

    # Layer 2 (out_features=1), computed group-wise so the logits land
    # lane-dense ([g,128] instead of a masked [tb,1] column): VPU multiply by
    # the w2 row, reduce the feature (lane) axis per group of 128 rows.
    # TODO(synk): the v7x-preferred MXU form of this contraction would need an
    # h/x lane<->sublane transpose that costs more than this reduce; kept on
    # VPU/XLU where it hides under the x HBM time on v5e/v6e.
    prod = h * w2_ref[...]                                   # [tb, 128]
    logits = jnp.sum(prod.reshape(g, 128, 128), axis=-1)     # [g, 128] dense
    logits = logits + b2_ref[0, 0]

    # Sigmoid on dense vregs: EUP exp + exact reciprocal (result <= 1.0).
    sig = pl.reciprocal(1.0 + jnp.exp(-logits), approx=False)
    o_ref[0] = sig


def _round_up(x, m):
    return (x + m - 1) // m * m


def _pick_batch_tile(batch, block_b):
    """Batch tile: multiple of 128 (lane-dense output groups). When possible,
    keep >=2 grid steps so ("parallel",) spans both v7x TensorCores. Capped at
    block_b (4096 keeps double-buffered f32 x tiles ~26 MB: inside v7x's
    64 MiB VMEM and comfortably inside v5e/v6e's 128 MiB)."""
    if batch <= 128:
        return 128
    two_step = _round_up(pl.cdiv(batch, 2), 128)
    return max(128, min(block_b, two_step))


@functools.partial(jax.jit, static_argnames=("block_b",))
def dnet_forward(x, w1, b1, w2, b2, *, block_b=4096):
    """Eval-mode DNet forward. Returns sigmoid probabilities [B, 1] (f32)."""
    x2d = x.reshape(-1, 784).astype(jnp.float32)
    B = x2d.shape[0]

    # Tiny one-time parameter casts/reshapes (cached inside the jit).
    w1_bf = w1.astype(jnp.bfloat16)
    b1_row = b1.reshape(1, 128).astype(jnp.float32)
    w2_row = w2.reshape(1, 128).astype(jnp.float32)
    b2_s = b2.reshape(1, 1).astype(jnp.float32)

    # For very small batches pad to one full 128-row group (negligible cost);
    # larger non-multiple batches rely on Pallas partial-block masking.
    if B < 128:
        x2d = jnp.pad(x2d, ((0, 128 - B), (0, 0)))

    tb = _pick_batch_tile(B, block_b)
    g = tb // 128
    n_tiles = pl.cdiv(max(B, 128), tb)
    grid = (n_tiles,)

    cost = pl.CostEstimate(
        flops=2 * B * 784 * 128 + 4 * B * 128,
        transcendentals=B,
        bytes_accessed=(B * 784 * 4 + 784 * 128 * 2 + 2 * 128 * 4 + 4
                        + n_tiles * tb * 4),
    )

    out = pl.pallas_call(
        dnet_kernel,
        out_shape=jax.ShapeDtypeStruct((n_tiles, g, 128), jnp.float32),
        grid=grid,
        in_specs=[
            pl.BlockSpec((tb, 784), lambda i: (i, 0)),    # x: pipelined tiles
            pl.BlockSpec((784, 128), lambda i: (0, 0)),   # w1: resident
            pl.BlockSpec((1, 128), lambda i: (0, 0)),     # b1: resident
            pl.BlockSpec((1, 128), lambda i: (0, 0)),     # w2 row: resident
            pl.BlockSpec(memory_space=pltpu.SMEM),        # b2 scalar in SMEM
        ],
        out_specs=pl.BlockSpec((1, g, 128), lambda i: (i, 0, 0)),
        compiler_params=pltpu.CompilerParams(
            dimension_semantics=("parallel",),
            vmem_limit_bytes=64 * 1024 * 1024,
        ),
        cost_estimate=cost,
    )(x2d, w1_bf, b1_row, w2_row, b2_s)

    # Lane-dense (tiles, g, 128) -> (B, 1); rows >= B are padding, drop them.
    return out.reshape(-1, 1)[:B]


def xavier_uniform(key, fan_in, fan_out):
    # Matches nn.init.xavier_uniform_: U(-a, a), a = sqrt(6/(fan_in+fan_out))
    a = math.sqrt(6.0 / (fan_in + fan_out))
    return jax.random.uniform(key, (fan_in, fan_out), jnp.float32, -a, a)


if __name__ == "__main__":
    key = jax.random.PRNGKey(0)
    kx, kw1, kw2 = jax.random.split(key, 3)

    # Deterministic parameters (Xavier-uniform weights, zero biases).
    w1 = xavier_uniform(kw1, 784, 128)          # Linear(784, 128).weight^T
    b1 = jnp.zeros((1, 128), jnp.float32)
    w2 = xavier_uniform(kw2, 128, 1)            # Linear(128, 1).weight^T
    b2 = jnp.zeros((1, 1), jnp.float32)

    # Small MNIST-like batch: [B, 1, 28, 28] NCHW, flattened in the wrapper.
    x = jax.random.normal(kx, (8, 1, 28, 28), jnp.float32)

    out = dnet_forward(x, w1, b1, w2, b2)
    jax.block_until_ready(out)

    # Pure-JAX f32 reference (eval-mode DNet) for a tolerance check.
    x2d = x.reshape(-1, 784)
    h_ref = x2d @ w1 + b1
    h_ref = jnp.where(h_ref > 0, h_ref, 0.2 * h_ref)
    ref = jax.nn.sigmoid(h_ref @ w2 + b2)

    assert out.shape == (8, 1)
    assert bool(jnp.all(jnp.isfinite(out)))
    assert bool(jnp.all((out >= 0.0) & (out <= 1.0)))
    assert bool(jnp.max(jnp.abs(out - ref)) < 2e-2)
    print("KERNEL_OK")
</pallas_src>

<mosaic_0001>
module attributes {stable_mosaic.version = 11 : i64} {
  func.func @dnet_kernel(%arg0: i32, %arg1: memref<128x784xf32, #tpu.memory_space<vmem>>, %arg2: memref<784x128xbf16, #tpu.memory_space<vmem>>, %arg3: memref<1x128xf32, #tpu.memory_space<vmem>>, %arg4: memref<1x128xf32, #tpu.memory_space<vmem>>, %arg5: memref<1x1xf32, #tpu.memory_space<smem>>, %arg6: memref<1x1x128xf32, #tpu.memory_space<vmem>>) attributes {dimension_semantics = [#tpu.dimension_semantics<parallel>], iteration_bounds = array<i64: 1>, scalar_prefetch = 0 : i64, scratch_operands = 0 : i64, tpu.core_type = #tpu.core_type<tc>, window_params = [{transform_indices = @transform_0, window_bounds = array<i64: 128, 784>}, {pipeline_mode = #tpu.pipeline_mode<synchronous>, transform_indices = @transform_1, window_bounds = array<i64: 784, 128>}, {pipeline_mode = #tpu.pipeline_mode<synchronous>, transform_indices = @transform_2, window_bounds = array<i64: 1, 128>}, {pipeline_mode = #tpu.pipeline_mode<synchronous>, transform_indices = @transform_3, window_bounds = array<i64: 1, 128>}, {transform_indices = @transform_4, window_bounds = array<i64: 1, 1>}, {transform_indices = @transform_5, window_bounds = array<i64: 1, 1, 128>}]} {
    %c0 = arith.constant 0 : index
    %c0_0 = arith.constant 0 : index
    %0 = vector.load %arg1[%c0, %c0_0] : memref<128x784xf32, #tpu.memory_space<vmem>>, vector<128x784xf32>
    %1 = arith.truncf %0 : vector<128x784xf32> to vector<128x784xbf16>
    %c0_1 = arith.constant 0 : index
    %c0_2 = arith.constant 0 : index
    %2 = vector.load %arg2[%c0_1, %c0_2] : memref<784x128xbf16, #tpu.memory_space<vmem>>, vector<784x128xbf16>
    %cst = arith.constant dense<0.000000e+00> : vector<128x128xf32>
    %3 = tpu.matmul %1, %2, %cst {dimension_numbers = #tpu.dot_dimension_numbers<[1], [0], [0], [1], [0, 0, 1, 1], [], []>} : vector<128x784xbf16>, vector<784x128xbf16>, vector<128x128xf32> -> vector<128x128xf32>
    %c0_3 = arith.constant 0 : index
    %c0_4 = arith.constant 0 : index
    %4 = vector.load %arg3[%c0_3, %c0_4] : memref<1x128xf32, #tpu.memory_space<vmem>>, vector<1x128xf32>
    %5 = vector.broadcast %4 : vector<1x128xf32> to vector<128x128xf32>
    %6 = arith.addf %3, %5 : vector<128x128xf32>
    %cst_5 = arith.constant 2.000000e-01 : f32
    %7 = vector.broadcast %cst_5 : f32 to vector<128x128xf32>
    %8 = arith.mulf %7, %6 : vector<128x128xf32>
    %9 = arith.maximumf %6, %8 : vector<128x128xf32>
    %c0_6 = arith.constant 0 : index
    %c0_7 = arith.constant 0 : index
    %10 = vector.load %arg4[%c0_6, %c0_7] : memref<1x128xf32, #tpu.memory_space<vmem>>, vector<1x128xf32>
    %11 = vector.broadcast %10 : vector<1x128xf32> to vector<128x128xf32>
    %12 = arith.mulf %9, %11 : vector<128x128xf32>
    %13 = vector.shape_cast %12 : vector<128x128xf32> to vector<1x128x128xf32>
    %cst_8 = arith.constant dense<0.000000e+00> : vector<1x128xf32>
    %14 = vector.multi_reduction <add>, %13, %cst_8 [2] : vector<1x128x128xf32> to vector<1x128xf32>
    %c0_9 = arith.constant 0 : index
    %c0_10 = arith.constant 0 : index
    %15 = memref.load %arg5[%c0_9, %c0_10] : memref<1x1xf32, #tpu.memory_space<smem>>
    %16 = vector.broadcast %15 : f32 to vector<1x128xf32>
    %17 = arith.addf %14, %16 : vector<1x128xf32>
    %cst_11 = arith.constant 0.000000e+00 : f32
    %18 = vector.broadcast %cst_11 : f32 to vector<1x128xf32>
    %19 = arith.subf %18, %17 : vector<1x128xf32>
    %20 = math.exp %19 : vector<1x128xf32>
    %cst_12 = arith.constant 1.000000e+00 : f32
    %21 = vector.broadcast %cst_12 : f32 to vector<1x128xf32>
    %22 = arith.addf %21, %20 : vector<1x128xf32>
    %23 = tpu.reciprocal %22 : vector<1x128xf32> -> vector<1x128xf32>
    %c0_13 = arith.constant 0 : index
    %c0_14 = arith.constant 0 : index
    %c0_15 = arith.constant 0 : index
    %24 = vector.load %arg6[%c0_13, %c0_14, %c0_15] : memref<1x1x128xf32, #tpu.memory_space<vmem>>, vector<1x1x128xf32>
    %25 = vector.shape_cast %24 : vector<1x1x128xf32> to vector<1x128xf32>
    %26 = vector.shape_cast %23 : vector<1x128xf32> to vector<1x1x128xf32>
    tpu.vector_store %arg6[%c0_13, %c0_14, %c0_15], %26 {strides = array<i32>} : memref<1x1x128xf32, #tpu.memory_space<vmem>>, vector<1x1x128xf32>,
    return
  }
  func.func @transform_0(%arg0: i32) -> (i32, i32) {
    %c0_i32 = arith.constant 0 : i32
    %c0_i32_0 = arith.constant 0 : i32
    return %arg0, %c0_i32 : i32, i32
  }
  func.func @transform_1(%arg0: i32) -> (i32, i32) {
    %c0_i32 = arith.constant 0 : i32
    %c0_i32_0 = arith.constant 0 : i32
    %c0_i32_1 = arith.constant 0 : i32
    return %c0_i32, %c0_i32_0 : i32, i32
  }
  func.func @transform_2(%arg0: i32) -> (i32, i32) {
    %c0_i32 = arith.constant 0 : i32
    %c0_i32_0 = arith.constant 0 : i32
    %c0_i32_1 = arith.constant 0 : i32
    return %c0_i32, %c0_i32_0 : i32, i32
  }
  func.func @transform_3(%arg0: i32) -> (i32, i32) {
    %c0_i32 = arith.constant 0 : i32
    %c0_i32_0 = arith.constant 0 : i32
    %c0_i32_1 = arith.constant 0 : i32
    return %c0_i32, %c0_i32_0 : i32, i32
  }
  func.func @transform_4(%arg0: i32) -> (i32, i32) {
    %c0_i32 = arith.constant 0 : i32
    %c0_i32_0 = arith.constant 0 : i32
    %c0_i32_1 = arith.constant 0 : i32
    return %c0_i32, %c0_i32_0 : i32, i32
  }
  func.func @transform_5(%arg0: i32) -> (i32, i32, i32) {
    %c0_i32 = arith.constant 0 : i32
    %c0_i32_0 = arith.constant 0 : i32
    %c0_i32_1 = arith.constant 0 : i32
    return %arg0, %c0_i32, %c0_i32_0 : i32, i32, i32
  }
}

</mosaic_0001>

<llo_original>
// kernel: dnet_forward.1
$region0: #{dnet_forward.1}
  #allocation0 [shape = 'u32[]', space=smem, size = 0x4, offset = 0x4, fixed_abs, tag = 'smem constant byte address 0x4 - core index']
  #allocation1 [shape = 'u32[72,128]{1,0:T(1,128)}', space=vmem, size = 0x9000, scoped, tag = 'internal scratch']
  #allocation2 [shape = 'f32[1,1]{1,0:T(1,128)S(6)}', space=smem, size = 0x200, scoped, tag = 'scoped memory for dnet_forward.1']
  %s0 = inlined_call_operand.vmem [shape: f32[128,784], index: 0, kind: input, shape index: {}]
  %s1 = inlined_call_operand.vmem [shape: bf16[784,128], index: 1, kind: input, shape index: {}]
  %s2 = inlined_call_operand.vmem [shape: f32[1,128], index: 2, kind: input, shape index: {}]
  %s3 = inlined_call_operand.vmem [shape: f32[1,128], index: 3, kind: input, shape index: {}]
  %s4 = inlined_call_operand.<no memory space> [shape: f32[1,1], index: 4, kind: input, shape index: {}]
  %s5 = inlined_call_operand.vmem [shape: f32[1,1,128], index: 5, kind: output, shape index: {}]
  %s6 = sld [smem:[#allocation0]]
  $region30: #{dnet_forward.1} parent=0
    _
  %s8 = ssub.s32 1, %s6
  %s9 = scalar_select 0, %s8, %s6
  %10 = sst [smem:[#allocation2]] %s4
  // Predicated region
  $region2: #{dnet_forward.1} parent=0 // pred_check
    _
  $region3: #{dnet_forward.1} parent=0 // pred_check_branch
    %12 = sbr.rel (0) target = $region5
  $region4: #{dnet_forward.1} parent=0 // pred_region
    _
  $region5: #{dnet_forward.1} parent=0 // pred_fallthru
    _
  // Predicated region
  $region6: #{dnet_forward.1} parent=0 // pred_check
    _
  $region7: #{dnet_forward.1} parent=0 // pred_check_branch
    %14 = sbr.rel (0) target = $region9
  $region8: #{dnet_forward.1} parent=0 // pred_region
    _
  $region9: #{dnet_forward.1} parent=0 // pred_fallthru
    _
  // Predicated region
  $region10: #{dnet_forward.1} parent=0 // pred_check
    _
  $region11: #{dnet_forward.1} parent=0 // pred_check_branch
    %16 = sbr.rel (0) target = $region13
  $region12: #{dnet_forward.1} parent=0 // pred_region
    _
  $region13: #{dnet_forward.1} parent=0 // pred_fallthru
    _
  // Predicated region
  $region14: #{dnet_forward.1} parent=0 // pred_check
    _
  $region15: #{dnet_forward.1} parent=0 // pred_check_branch
    %18 = sbr.rel (0) target = $region17
  $region16: #{dnet_forward.1} parent=0 // pred_region
    _
  $region17: #{dnet_forward.1} parent=0 // pred_fallthru
    _
  // Predicated region
  $region18: #{dnet_forward.1} parent=0 // pred_check
    _
  $region19: #{dnet_forward.1} parent=0 // pred_check_branch
    %20 = sbr.rel (0) target = $region21
  $region20: #{dnet_forward.1} parent=0 // pred_region
    _
  $region21: #{dnet_forward.1} parent=0 // pred_fallthru
    _
  %v22 = vld [vmem:[%s0] sm:$0xff]
  %v23 = vld [vmem:[%s0 + $0x8] sm:$0xff]
  %v24 = vld [vmem:[%s0 + $0x10] sm:$0xff]
  %v25 = vld [vmem:[%s0 + $0x18] sm:$0xff]
  %v26 = vld [vmem:[%s0 + $0x20] sm:$0xff]
  %v27 = vld [vmem:[%s0 + $0x28] sm:$0xff]
  %v28 = vld [vmem:[%s0 + $0x30] sm:$0xff]
  %v29 = vld [vmem:[%s0 + $0x38] sm:$0xff]
  %v30 = vld [vmem:[%s0 + $0x40] sm:$0xff]
  %v31 = vld [vmem:[%s0 + $0x48] sm:$0xff]
  %v32 = vld [vmem:[%s0 + $0x50] sm:$0xff]
  %v33 = vld [vmem:[%s0 + $0x58] sm:$0xff]
  %v34 = vld [vmem:[%s0 + $0x60] sm:$0xff]
  %v35 = vld [vmem:[%s0 + $0x68] sm:$0xff]
  %v36 = vld [vmem:[%s0 + $0x70] sm:$0xff]
  %v37 = vld [vmem:[%s0 + $0x78] sm:$0xff]
  %v38 = vld [vmem:[%s0 + $0x80] sm:$0xff]
  %v39 = vld [vmem:[%s0 + $0x88] sm:$0xff]
  %v40 = vld [vmem:[%s0 + $0x90] sm:$0xff]
  %v41 = vld [vmem:[%s0 + $0x98] sm:$0xff]
  %v42 = vld [vmem:[%s0 + $0xa0] sm:$0xff]
  %v43 = vld [vmem:[%s0 + $0xa8] sm:$0xff]
  %v44 = vld [vmem:[%s0 + $0xb0] sm:$0xff]
  %v45 = vld [vmem:[%s0 + $0xb8] sm:$0xff]
  %v46 = vld [vmem:[%s0 + $0xc0] sm:$0xff]
  %v47 = vld [vmem:[%s0 + $0xc8] sm:$0xff]
  %v48 = vld [vmem:[%s0 + $0xd0] sm:$0xff]
  %v49 = vld [vmem:[%s0 + $0xd8] sm:$0xff]
  %v50 = vld [vmem:[%s0 + $0xe0] sm:$0xff]
  %v51 = vld [vmem:[%s0 + $0xe8] sm:$0xff]
  %v52 = vld [vmem:[%s0 + $0xf0] sm:$0xff]
  %v53 = vld [vmem:[%s0 + $0xf8] sm:$0xff]
  %v54 = vld [vmem:[%s0 + $0x100] sm:$0xff]
  %v55 = vld [vmem:[%s0 + $0x108] sm:$0xff]
  %v56 = vld [vmem:[%s0 + $0x110] sm:$0xff]
  %v57 = vld [vmem:[%s0 + $0x118] sm:$0xff]
  %v58 = vld [vmem:[%s0 + $0x120] sm:$0xff]
  %v59 = vld [vmem:[%s0 + $0x128] sm:$0xff]
  %v60 = vld [vmem:[%s0 + $0x130] sm:$0xff]
  %v61 = vld [vmem:[%s0 + $0x138] sm:$0xff]
  %v62 = vld [vmem:[%s0 + $0x140] sm:$0xff]
  %v63 = vld [vmem:[%s0 + $0x148] sm:$0xff]
  %v64 = vld [vmem:[%s0 + $0x150] sm:$0xff]
  %v65 = vld [vmem:[%s0 + $0x158] sm:$0xff]
  %v66 = vld [vmem:[%s0 + $0x160] sm:$0xff]
  %v67 = vld [vmem:[%s0 + $0x168] sm:$0xff]
  %v68 = vld [vmem:[%s0 + $0x170] sm:$0xff]
  %v69 = vld [vmem:[%s0 + $0x178] sm:$0xff]
  %v70 = vld [vmem:[%s0 + $0x180] sm:$0xff]
  %v71 = vld [vmem:[%s0 + $0x188] sm:$0xff]
  %v72 = vld [vmem:[%s0 + $0x190] sm:$0xff]
  %v73 = vld [vmem:[%s0 + $0x198] sm:$0xff]
  %v74 = vld [vmem:[%s0 + $0x1a0] sm:$0xff]
  %v75 = vld [vmem:[%s0 + $0x1a8] sm:$0xff]
  %v76 = vld [vmem:[%s0 + $0x1b0] sm:$0xff]
  %v77 = vld [vmem:[%s0 + $0x1b8] sm:$0xff]
  %v78 = vld [vmem:[%s0 + $0x1c0] sm:$0xff]
  %v79 = vld [vmem:[%s0 + $0x1c8] sm:$0xff]
  %v80 = vld [vmem:[%s0 + $0x1d0] sm:$0xff]
  %v81 = vld [vmem:[%s0 + $0x1d8] sm:$0xff]
  %v82 = vld [vmem:[%s0 + $0x1e0] sm:$0xff]
  %v83 = vld [vmem:[%s0 + $0x1e8] sm:$0xff]
  %v84 = vld [vmem:[%s0 + $0x1f0] sm:$0xff]
  %v85 = vld [vmem:[%s0 + $0x1f8] sm:$0xff]
  %v86 = vld [vmem:[%s0 + $0x200] sm:$0xff]
  %v87 = vld [vmem:[%s0 + $0x208] sm:$0xff]
  %v88 = vld [vmem:[%s0 + $0x210] sm:$0xff]
  %v89 = vld [vmem:[%s0 + $0x218] sm:$0xff]
  %v90 = vld [vmem:[%s0 + $0x220] sm:$0xff]
  %v91 = vld [vmem:[%s0 + $0x228] sm:$0xff]
  %v92 = vld [vmem:[%s0 + $0x230] sm:$0xff]
  %v93 = vld [vmem:[%s0 + $0x238] sm:$0xff]
  %v94 = vld [vmem:[%s0 + $0x240] sm:$0xff]
  %v95 = vld [vmem:[%s0 + $0x248] sm:$0xff]
  %v96 = vld [vmem:[%s0 + $0x250] sm:$0xff]
  %v97 = vld [vmem:[%s0 + $0x258] sm:$0xff]
  %v98 = vld [vmem:[%s0 + $0x260] sm:$0xff]
  %v99 = vld [vmem:[%s0 + $0x268] sm:$0xff]
  %v100 = vld [vmem:[%s0 + $0x270] sm:$0xff]
  %v101 = vld [vmem:[%s0 + $0x278] sm:$0xff]
  %v102 = vld [vmem:[%s0 + $0x280] sm:$0xff]
  %v103 = vld [vmem:[%s0 + $0x288] sm:$0xff]
  %v104 = vld [vmem:[%s0 + $0x290] sm:$0xff]
  %v105 = vld [vmem:[%s0 + $0x298] sm:$0xff]
  %v106 = vld [vmem:[%s0 + $0x2a0] sm:$0xff]
  %v107 = vld [vmem:[%s0 + $0x2a8] sm:$0xff]
  %v108 = vld [vmem:[%s0 + $0x2b0] sm:$0xff]
  %v109 = vld [vmem:[%s0 + $0x2b8] sm:$0xff]
  %v110 = vld [vmem:[%s0 + $0x2c0] sm:$0xff]
  %v111 = vld [vmem:[%s0 + $0x2c8] sm:$0xff]
  %v112 = vld [vmem:[%s0 + $0x2d0] sm:$0xff]
  %v113 = vld [vmem:[%s0 + $0x2d8] sm:$0xff]
  %v114 = vld [vmem:[%s0 + $0x2e0] sm:$0xff]
  %v115 = vld [vmem:[%s0 + $0x2e8] sm:$0xff]
  %v116 = vld [vmem:[%s0 + $0x2f0] sm:$0xff]
  %v117 = vld [vmem:[%s0 + $0x2f8] sm:$0xff]
  %v118 = vld [vmem:[%s0 + $0x300] sm:$0xff]
  %v119 = vld [vmem:[%s0 + $0x308] sm:$0xff]
  %v120 = vld [vmem:[%s0 + $0x310] sm:$0xff]
  %v121 = vld [vmem:[%s0 + $0x318] sm:$0xff]
  %v122 = vld [vmem:[%s0 + $0x320] sm:$0xff]
  %v123 = vld [vmem:[%s0 + $0x328] sm:$0xff]
  %v124 = vld [vmem:[%s0 + $0x330] sm:$0xff]
  %v125 = vld [vmem:[%s0 + $0x338] sm:$0xff]
  %v126 = vld [vmem:[%s0 + $0x340] sm:$0xff]
  %v127 = vld [vmem:[%s0 + $0x348] sm:$0xff]
  %v128 = vld [vmem:[%s0 + $0x350] sm:$0xff]
  %v129 = vld [vmem:[%s0 + $0x358] sm:$0xff]
  %v130 = vld [vmem:[%s0 + $0x360] sm:$0xff]
  %v131 = vld [vmem:[%s0 + $0x368] sm:$0xff]
  %v132 = vld [vmem:[%s0 + $0x370] sm:$0xff]
  %v133 = vld [vmem:[%s0 + $0x378] sm:$0xff]
  %v134 = vpack.c.bf16 %v29, %v22
  %v135 = vpack.c.bf16 %v30, %v23
  %v136 = vpack.c.bf16 %v31, %v24
  %v137 = vpack.c.bf16 %v32, %v25
  %v138 = vpack.c.bf16 %v33, %v26
  %v139 = vpack.c.bf16 %v34, %v27
  %v140 = vpack.c.bf16 %v35, %v28
  %v141 = vpack.c.bf16 %v43, %v36
  %v142 = vpack.c.bf16 %v44, %v37
  %v143 = vpack.c.bf16 %v45, %v38
  %v144 = vpack.c.bf16 %v46, %v39
  %v145 = vpack.c.bf16 %v47, %v40
  %v146 = vpack.c.bf16 %v48, %v41
  %v147 = vpack.c.bf16 %v49, %v42
  %v148 = vpack.c.bf16 %v57, %v50
  %v149 = vpack.c.bf16 %v58, %v51
  %v150 = vpack.c.bf16 %v59, %v52
  %v151 = vpack.c.bf16 %v60, %v53
  %v152 = vpack.c.bf16 %v61, %v54
  %v153 = vpack.c.bf16 %v62, %v55
  %v154 = vpack.c.bf16 %v63, %v56
  %v155 = vpack.c.bf16 %v71, %v64
  %v156 = vpack.c.bf16 %v72, %v65
  %v157 = vpack.c.bf16 %v73, %v66
  %v158 = vpack.c.bf16 %v74, %v67
  %v159 = vpack.c.bf16 %v75, %v68
  %v160 = vpack.c.bf16 %v76, %v69
  %v161 = vpack.c.bf16 %v77, %v70
  %v162 = vpack.c.bf16 %v85, %v78
  %v163 = vpack.c.bf16 %v86, %v79
  %v164 = vpack.c.bf16 %v87, %v80
  %v165 = vpack.c.bf16 %v88, %v81
  %v166 = vpack.c.bf16 %v89, %v82
  %v167 = vpack.c.bf16 %v90, %v83
  %v168 = vpack.c.bf16 %v91, %v84
  %v169 = vpack.c.bf16 %v99, %v92
  %v170 = vpack.c.bf16 %v100, %v93
  %v171 = vpack.c.bf16 %v101, %v94
  %v172 = vpack.c.bf16 %v102, %v95
  %v173 = vpack.c.bf16 %v103, %v96
  %v174 = vpack.c.bf16 %v104, %v97
  %v175 = vpack.c.bf16 %v105, %v98
  %v176 = vpack.c.bf16 %v113, %v106
  %v177 = vpack.c.bf16 %v114, %v107
  %v178 = vpack.c.bf16 %v115, %v108
  %v179 = vpack.c.bf16 %v116, %v109
  %v180 = vpack.c.bf16 %v117, %v110
  %v181 = vpack.c.bf16 %v118, %v111
  %v182 = vpack.c.bf16 %v119, %v112
  %v183 = vpack.c.bf16 %v127, %v120
  %v184 = vpack.c.bf16 %v128, %v121
  %v185 = vpack.c.bf16 %v129, %v122
  %v186 = vpack.c.bf16 %v130, %v123
  %v187 = vpack.c.bf16 %v131, %v124
  %v188 = vpack.c.bf16 %v132, %v125
  %v189 = vpack.c.bf16 %v133, %v126
  %v190 = vld [vmem:[%s1] sm:$0xf]
  %v191 = vld [vmem:[%s1 + $0x4] sm:$0xf]
  %v192 = vld [vmem:[%s1 + $0x8] sm:$0xf]
  %v193 = vld [vmem:[%s1 + $0xc] sm:$0xf]
  %v194 = vld [vmem:[%s1 + $0x10] sm:$0xf]
  %v195 = vld [vmem:[%s1 + $0x14] sm:$0xf]
  %v196 = vld [vmem:[%s1 + $0x18] sm:$0xf]
  %v197 = vld [vmem:[%s1 + $0x1c] sm:$0xf]
  %v198 = vld [vmem:[%s1 + $0x20] sm:$0xf]
  %v199 = vld [vmem:[%s1 + $0x24] sm:$0xf]
  %v200 = vld [vmem:[%s1 + $0x28] sm:$0xf]
  %v201 = vld [vmem:[%s1 + $0x2c] sm:$0xf]
  %v202 = vld [vmem:[%s1 + $0x30] sm:$0xf]
  %v203 = vld [vmem:[%s1 + $0x34] sm:$0xf]
  %v204 = vld [vmem:[%s1 + $0x38] sm:$0xf]
  %v205 = vld [vmem:[%s1 + $0x3c] sm:$0xf]
  %v206 = vld [vmem:[%s1 + $0x40] sm:$0xf]
  %v207 = vld [vmem:[%s1 + $0x44] sm:$0xf]
  %v208 = vld [vmem:[%s1 + $0x48] sm:$0xf]
  %v209 = vld [vmem:[%s1 + $0x4c] sm:$0xf]
  %v210 = vld [vmem:[%s1 + $0x50] sm:$0xf]
  %v211 = vld [vmem:[%s1 + $0x54] sm:$0xf]
  %v212 = vld [vmem:[%s1 + $0x58] sm:$0xf]
  %v213 = vld [vmem:[%s1 + $0x5c] sm:$0xf]
  %v214 = vld [vmem:[%s1 + $0x60] sm:$0xf]
  %v215 = vld [vmem:[%s1 + $0x64] sm:$0xf]
  %v216 = vld [vmem:[%s1 + $0x68] sm:$0xf]
  %v217 = vld [vmem:[%s1 + $0x6c] sm:$0xf]
  %v218 = vld [vmem:[%s1 + $0x70] sm:$0xf]
  %v219 = vld [vmem:[%s1 + $0x74] sm:$0xf]
  %v220 = vld [vmem:[%s1 + $0x78] sm:$0xf]
  %v221 = vld [vmem:[%s1 + $0x7c] sm:$0xf]
  %v222 = vld [vmem:[%s1 + $0x80] sm:$0xf]
  %v223 = vld [vmem:[%s1 + $0x84] sm:$0xf]
  %v224 = vld [vmem:[%s1 + $0x88] sm:$0xf]
  %v225 = vld [vmem:[%s1 + $0x8c] sm:$0xf]
  %v226 = vld [vmem:[%s1 + $0x90] sm:$0xf]
  %v227 = vld [vmem:[%s1 + $0x94] sm:$0xf]
  %v228 = vld [vmem:[%s1 + $0x98] sm:$0xf]
  %v229 = vld [vmem:[%s1 + $0x9c] sm:$0xf]
  %v230 = vld [vmem:[%s1 + $0xa0] sm:$0xf]
  %v231 = vld [vmem:[%s1 + $0xa4] sm:$0xf]
  %v232 = vld [vmem:[%s1 + $0xa8] sm:$0xf]
  %v233 = vld [vmem:[%s1 + $0xac] sm:$0xf]
  %v234 = vld [vmem:[%s1 + $0xb0] sm:$0xf]
  %v235 = vld [vmem:[%s1 + $0xb4] sm:$0xf]
  %v236 = vld [vmem:[%s1 + $0xb8] sm:$0xf]
  %v237 = vld [vmem:[%s1 + $0xbc] sm:$0xf]
  %v238 = vld [vmem:[%s1 + $0xc0] sm:$0xf]
  %v239 = vld [vmem:[%s1 + $0xc4] sm:$0xf]
  %v240 = vld [vmem:[%s1 + $0xc8] sm:$0xf]
  %v241 = vld [vmem:[%s1 + $0xcc] sm:$0xf]
  %v242 = vld [vmem:[%s1 + $0xd0] sm:$0xf]
  %v243 = vld [vmem:[%s1 + $0xd4] sm:$0xf]
  %v244 = vld [vmem:[%s1 + $0xd8] sm:$0xf]
  %v245 = vld [vmem:[%s1 + $0xdc] sm:$0xf]
  %v246 = vld [vmem:[%s1 + $0xe0] sm:$0xf]
  %v247 = vld [vmem:[%s1 + $0xe4] sm:$0xf]
  %v248 = vld [vmem:[%s1 + $0xe8] sm:$0xf]
  %v249 = vld [vmem:[%s1 + $0xec] sm:$0xf]
  %v250 = vld [vmem:[%s1 + $0xf0] sm:$0xf]
  %v251 = vld [vmem:[%s1 + $0xf4] sm:$0xf]
  %v252 = vld [vmem:[%s1 + $0xf8] sm:$0xf]
  %v253 = vld [vmem:[%s1 + $0xfc] sm:$0xf]
  %v254 = vld [vmem:[%s1 + $0x100] sm:$0xf]
  %v255 = vld [vmem:[%s1 + $0x104] sm:$0xf]
  %v256 = vld [vmem:[%s1 + $0x108] sm:$0xf]
  %v257 = vld [vmem:[%s1 + $0x10c] sm:$0xf]
  %v258 = vld [vmem:[%s1 + $0x110] sm:$0xf]
  %v259 = vld [vmem:[%s1 + $0x114] sm:$0xf]
  %v260 = vld [vmem:[%s1 + $0x118] sm:$0xf]
  %v261 = vld [vmem:[%s1 + $0x11c] sm:$0xf]
  %v262 = vld [vmem:[%s1 + $0x120] sm:$0xf]
  %v263 = vld [vmem:[%s1 + $0x124] sm:$0xf]
  %v264 = vld [vmem:[%s1 + $0x128] sm:$0xf]
  %v265 = vld [vmem:[%s1 + $0x12c] sm:$0xf]
  %v266 = vld [vmem:[%s1 + $0x130] sm:$0xf]
  %v267 = vld [vmem:[%s1 + $0x134] sm:$0xf]
  %v268 = vld [vmem:[%s1 + $0x138] sm:$0xf]
  %v269 = vld [vmem:[%s1 + $0x13c] sm:$0xf]
  %v270 = vld [vmem:[%s1 + $0x140] sm:$0xf]
  %v271 = vld [vmem:[%s1 + $0x144] sm:$0xf]
  %v272 = vld [vmem:[%s1 + $0x148] sm:$0xf]
  %v273 = vld [vmem:[%s1 + $0x14c] sm:$0xf]
  %v274 = vld [vmem:[%s1 + $0x150] sm:$0xf]
  %v275 = vld [vmem:[%s1 + $0x154] sm:$0xf]
  %v276 = vld [vmem:[%s1 + $0x158] sm:$0xf]
  %v277 = vld [vmem:[%s1 + $0x15c] sm:$0xf]
  %v278 = vld [vmem:[%s1 + $0x160] sm:$0xf]
  %v279 = vld [vmem:[%s1 + $0x164] sm:$0xf]
  %v280 = vld [vmem:[%s1 + $0x168] sm:$0xf]
  %v281 = vld [vmem:[%s1 + $0x16c] sm:$0xf]
  %v282 = vld [vmem:[%s1 + $0x170] sm:$0xf]
  %v283 = vld [vmem:[%s1 + $0x174] sm:$0xf]
  %v284 = vld [vmem:[%s1 + $0x178] sm:$0xf]
  %v285 = vld [vmem:[%s1 + $0x17c] sm:$0xf]
  %v286 = vld [vmem:[%s1 + $0x180] sm:$0xf]
  %v287 = vld [vmem:[%s1 + $0x184] sm:$0xf]
  %v288 = vld [vmem:[%s2] sm:$0x1]
  %v290 = vperm.slane %v288, 0
  %v390 = vunpack.c.l.b16 %v190
  %v391 = vunpack.c.l.b16 %v191
  %v392 = vunpack.c.l.b16 %v192
  %v393 = vunpack.c.l.b16 %v193
  %v394 = vunpack.c.l.b16 %v194
  %v395 = vunpack.c.l.b16 %v195
  %v396 = vunpack.c.l.b16 %v196
  %v397 = vunpack.c.l.b16 %v197
  %v398 = vunpack.c.l.b16 %v198
  %v399 = vunpack.c.l.b16 %v199
  %v400 = vunpack.c.l.b16 %v200
  %v401 = vunpack.c.l.b16 %v201
  %v402 = vunpack.c.l.b16 %v202
  %v403 = vunpack.c.l.b16 %v203
  %v404 = vunpack.c.l.b16 %v204
  %v405 = vunpack.c.l.b16 %v205
  %v406 = vunpack.c.l.b16 %v206
  %v407 = vunpack.c.l.b16 %v207
  %v408 = vunpack.c.l.b16 %v208
  %v409 = vunpack.c.l.b16 %v209
  %v410 = vunpack.c.l.b16 %v210
  %v411 = vunpack.c.l.b16 %v211
  %v412 = vunpack.c.l.b16 %v212
  %v413 = vunpack.c.l.b16 %v213
  %v414 = vunpack.c.l.b16 %v214
  %v415 = vunpack.c.l.b16 %v215
  %v416 = vunpack.c.l.b16 %v216
  %v417 = vunpack.c.l.b16 %v217
  %v418 = vunpack.c.l.b16 %v218
  %v419 = vunpack.c.l.b16 %v219
  %v420 = vunpack.c.l.b16 %v220
  %v421 = vunpack.c.l.b16 %v221
  %v422 = vunpack.c.l.b16 %v222
  %v423 = vunpack.c.l.b16 %v223
  %v424 = vunpack.c.l.b16 %v224
  %v425 = vunpack.c.l.b16 %v225
  %v426 = vunpack.c.l.b16 %v226
  %v427 = vunpack.c.l.b16 %v227
  %v428 = vunpack.c.l.b16 %v228
  %v429 = vunpack.c.l.b16 %v229
  %v430 = vunpack.c.l.b16 %v230
  %v431 = vunpack.c.l.b16 %v231
  %v432 = vunpack.c.l.b16 %v232
  %v433 = vunpack.c.l.b16 %v233
  %v434 = vunpack.c.l.b16 %v234
  %v435 = vunpack.c.l.b16 %v235
  %v436 = vunpack.c.l.b16 %v236
  %v437 = vunpack.c.l.b16 %v237
  %v438 = vunpack.c.l.b16 %v238
  %v439 = vunpack.c.l.b16 %v239
  %v440 = vunpack.c.l.b16 %v240
  %v441 = vunpack.c.l.b16 %v241
  %v442 = vunpack.c.l.b16 %v242
  %v443 = vunpack.c.l.b16 %v243
  %v444 = vunpack.c.l.b16 %v244
  %v445 = vunpack.c.l.b16 %v245
  %v446 = vunpack.c.l.b16 %v246
  %v447 = vunpack.c.l.b16 %v247
  %v448 = vunpack.c.l.b16 %v248
  %v449 = vunpack.c.l.b16 %v249
  %v450 = vunpack.c.l.b16 %v250
  %v451 = vunpack.c.l.b16 %v251
  %v452 = vunpack.c.l.b16 %v252
  %v453 = vunpack.c.l.b16 %v253
  %v454 = vunpack.c.l.b16 %v254
  %v455 = vunpack.c.l.b16 %v255
  %v456 = vunpack.c.l.b16 %v256
  %v457 = vunpack.c.l.b16 %v257
  %v458 = vunpack.c.l.b16 %v258
  %v459 = vunpack.c.l.b16 %v259
  %v460 = vunpack.c.l.b16 %v260
  %v461 = vunpack.c.l.b16 %v261
  %v462 = vunpack.c.l.b16 %v262
  %v463 = vunpack.c.l.b16 %v263
  %v464 = vunpack.c.l.b16 %v264
  %v465 = vunpack.c.l.b16 %v265
  %v466 = vunpack.c.l.b16 %v266
  %v467 = vunpack.c.l.b16 %v267
  %v468 = vunpack.c.l.b16 %v268
  %v469 = vunpack.c.l.b16 %v269
  %v470 = vunpack.c.l.b16 %v270
  %v471 = vunpack.c.l.b16 %v271
  %v472 = vunpack.c.l.b16 %v272
  %v473 = vunpack.c.l.b16 %v273
  %v474 = vunpack.c.l.b16 %v274
  %v475 = vunpack.c.l.b16 %v275
  %v476 = vunpack.c.l.b16 %v276
  %v477 = vunpack.c.l.b16 %v277
  %v478 = vunpack.c.l.b16 %v278
  %v479 = vunpack.c.l.b16 %v279
  %v480 = vunpack.c.l.b16 %v280
  %v481 = vunpack.c.l.b16 %v281
  %v482 = vunpack.c.l.b16 %v282
  %v483 = vunpack.c.l.b16 %v283
  %v484 = vunpack.c.l.b16 %v284
  %v485 = vunpack.c.l.b16 %v285
  %v486 = vunpack.c.l.b16 %v286
  %v487 = vunpack.c.l.b16 %v287
  %v488 = vpack.c.b16 %v391, %v390
  %v489 = vpack.c.b16 %v393, %v392
  %v490 = vpack.c.b16 %v395, %v394
  %v491 = vpack.c.b16 %v397, %v396
  %v492 = vpack.c.b16 %v399, %v398
  %v493 = vpack.c.b16 %v401, %v400
  %v494 = vpack.c.b16 %v403, %v402
  %v495 = vpack.c.b16 %v405, %v404
  %v496 = vpack.c.b16 %v407, %v406
  %v497 = vpack.c.b16 %v409, %v408
  %v498 = vpack.c.b16 %v411, %v410
  %v499 = vpack.c.b16 %v413, %v412
  %v500 = vpack.c.b16 %v415, %v414
  %v501 = vpack.c.b16 %v417, %v416
  %v502 = vpack.c.b16 %v419, %v418
  %v503 = vpack.c.b16 %v421, %v420
  %v504 = vpack.c.b16 %v423, %v422
  %v505 = vpack.c.b16 %v425, %v424
  %v506 = vpack.c.b16 %v427, %v426
  %v507 = vpack.c.b16 %v429, %v428
  %v508 = vpack.c.b16 %v431, %v430
  %v509 = vpack.c.b16 %v433, %v432
  %v510 = vpack.c.b16 %v435, %v434
  %v511 = vpack.c.b16 %v437, %v436
  %v512 = vpack.c.b16 %v439, %v438
  %v513 = vpack.c.b16 %v441, %v440
  %v514 = vpack.c.b16 %v443, %v442
  %v515 = vpack.c.b16 %v445, %v444
  %v516 = vpack.c.b16 %v447, %v446
  %v517 = vpack.c.b16 %v449, %v448
  %v518 = vpack.c.b16 %v451, %v450
  %v519 = vpack.c.b16 %v453, %v452
  %v520 = vpack.c.b16 %v455, %v454
  %v521 = vpack.c.b16 %v457, %v456
  %v522 = vpack.c.b16 %v459, %v458
  %v523 = vpack.c.b16 %v461, %v460
  %v524 = vpack.c.b16 %v463, %v462
  %v525 = vpack.c.b16 %v465, %v464
  %v526 = vpack.c.b16 %v467, %v466
  %v527 = vpack.c.b16 %v469, %v468
  %v528 = vpack.c.b16 %v471, %v470
  %v529 = vpack.c.b16 %v473, %v472
  %v530 = vpack.c.b16 %v475, %v474
  %v531 = vpack.c.b16 %v477, %v476
  %v532 = vpack.c.b16 %v479, %v478
  %v533 = vpack.c.b16 %v481, %v480
  %v534 = vpack.c.b16 %v483, %v482
  %v535 = vpack.c.b16 %v485, %v484
  %v536 = vpack.c.b16 %v487, %v486
  %vm586 = vcmask 130048
  %v588 = vsel %vm586, %v140, 0
  %v591 = vsel %vm586, %v147, 0
  %v594 = vsel %vm586, %v154, 0
  %v597 = vsel %vm586, %v161, 0
  %v600 = vsel %vm586, %v168, 0
  %v603 = vsel %vm586, %v175, 0
  %v606 = vsel %vm586, %v182, 0
  %v609 = vsel %vm586, %v189, 0
  %611 = vmatpush.bf16.msra.mxu0 %v495
  %612 = vmatpush.bf16.msra.mxu0 %v494
  %613 = vmatpush.bf16.msra.mxu0 %v493
  %614 = vmatpush.bf16.msra.mxu0 %v492
  %615 = vmatpush.bf16.msra.mxu0 %v491
  %616 = vmatpush.bf16.msra.mxu0 %v490
  %617 = vmatpush.bf16.msra.mxu0 %v489
  %618 = vmatpush.bf16.msra.mxu0 %v488
  %619 = vmatmul.bf16.gmra.mxu0 %v134
  %v620 = vpop.f32.mrf.mxu0
  %v621 = vadd.f32 %v290, %v620
  %v622 = vpop.f32.mrf.mxu0
  %v623 = vadd.f32 %v290, %v622
  %624 = vmatmul.bf16.gmra.mxu0 %v141
  %v625 = vpop.f32.mrf.mxu0
  %v626 = vadd.f32 %v290, %v625
  %v627 = vpop.f32.mrf.mxu0
  %v628 = vadd.f32 %v290, %v627
  %629 = vmatmul.bf16.gmra.mxu0 %v148
  %v630 = vpop.f32.mrf.mxu0
  %v631 = vadd.f32 %v290, %v630
  %v632 = vpop.f32.mrf.mxu0
  %v633 = vadd.f32 %v290, %v632
  %634 = vmatmul.bf16.gmra.mxu0 %v155
  %v635 = vpop.f32.mrf.mxu0
  %v636 = vadd.f32 %v290, %v635
  %v637 = vpop.f32.mrf.mxu0
  %v638 = vadd.f32 %v290, %v637
  %639 = vmatmul.bf16.gmra.mxu0 %v162
  %v640 = vpop.f32.mrf.mxu0
  %v641 = vadd.f32 %v290, %v640
  %v642 = vpop.f32.mrf.mxu0
  %v643 = vadd.f32 %v290, %v642
  %644 = vmatmul.bf16.gmra.mxu0 %v169
  %v645 = vpop.f32.mrf.mxu0
  %v646 = vadd.f32 %v290, %v645
  %v647 = vpop.f32.mrf.mxu0
  %v648 = vadd.f32 %v290, %v647
  %649 = vmatmul.bf16.gmra.mxu0 %v176
  %v650 = vpop.f32.mrf.mxu0
  %v651 = vadd.f32 %v290, %v650
  %v652 = vpop.f32.mrf.mxu0
  %v653 = vadd.f32 %v290, %v652
  %654 = vmatmul.bf16.gmra.mxu0 %v183
  %v655 = vpop.f32.mrf.mxu0
  %v656 = vadd.f32 %v290, %v655
  %v657 = vpop.f32.mrf.mxu0
  %v658 = vadd.f32 %v290, %v657
  %659 = vdwg.mxu0
  %660 = vmatpush.bf16.msra.mxu0 %v503
  %661 = vmatpush.bf16.msra.mxu0 %v502
  %662 = vmatpush.bf16.msra.mxu0 %v501
  %663 = vmatpush.bf16.msra.mxu0 %v500
  %664 = vmatpush.bf16.msra.mxu0 %v499
  %665 = vmatpush.bf16.msra.mxu0 %v498
  %666 = vmatpush.bf16.msra.mxu0 %v497
  %667 = vmatpush.bf16.msra.mxu0 %v496
  %668 = vmatmul.bf16.gmra.mxu0 %v135
  %v669 = vpop.f32.mrf.mxu0
  %v670 = vadd.f32 %v621, %v669
  %v671 = vpop.f32.mrf.mxu0
  %v672 = vadd.f32 %v623, %v671
  %673 = vmatmul.bf16.gmra.mxu0 %v142
  %v674 = vpop.f32.mrf.mxu0
  %v675 = vadd.f32 %v626, %v674
  %v676 = vpop.f32.mrf.mxu0
  %v677 = vadd.f32 %v628, %v676
  %678 = vmatmul.bf16.gmra.mxu0 %v149
  %v679 = vpop.f32.mrf.mxu0
  %v680 = vadd.f32 %v631, %v679
  %v681 = vpop.f32.mrf.mxu0
  %v682 = vadd.f32 %v633, %v681
  %683 = vmatmul.bf16.gmra.mxu0 %v156
  %v684 = vpop.f32.mrf.mxu0
  %v685 = vadd.f32 %v636, %v684
  %v686 = vpop.f32.mrf.mxu0
  %v687 = vadd.f32 %v638, %v686
  %688 = vmatmul.bf16.gmra.mxu0 %v163
  %v689 = vpop.f32.mrf.mxu0
  %v690 = vadd.f32 %v641, %v689
  %v691 = vpop.f32.mrf.mxu0
  %v692 = vadd.f32 %v643, %v691
  %693 = vmatmul.bf16.gmra.mxu0 %v170
  %v694 = vpop.f32.mrf.mxu0
  %v695 = vadd.f32 %v646, %v694
  %v696 = vpop.f32.mrf.mxu0
  %v697 = vadd.f32 %v648, %v696
  %698 = vmatmul.bf16.gmra.mxu0 %v177
  %v699 = vpop.f32.mrf.mxu0
  %v700 = vadd.f32 %v651, %v699
  %v701 = vpop.f32.mrf.mxu0
  %v702 = vadd.f32 %v653, %v701
  %703 = vmatmul.bf16.gmra.mxu0 %v184
  %v704 = vpop.f32.mrf.mxu0
  %v705 = vadd.f32 %v656, %v704
  %v706 = vpop.f32.mrf.mxu0
  %v707 = vadd.f32 %v658, %v706
  %708 = vdwg.mxu0
  %709 = vmatpush.bf16.msra.mxu0 %v511
  %710 = vmatpush.bf16.msra.mxu0 %v510
  %711 = vmatpush.bf16.msra.mxu0 %v509
  %712 = vmatpush.bf16.msra.mxu0 %v508
  %713 = vmatpush.bf16.msra.mxu0 %v507
  %714 = vmatpush.bf16.msra.mxu0 %v506
  %715 = vmatpush.bf16.msra.mxu0 %v505
  %716 = vmatpush.bf16.msra.mxu0 %v504
  %717 = vmatmul.bf16.gmra.mxu0 %v136
  %v718 = vpop.f32.mrf.mxu0
  %v719 = vadd.f32 %v670, %v718
  %v720 = vpop.f32.mrf.mxu0
  %v721 = vadd.f32 %v672, %v720
  %722 = vmatmul.bf16.gmra.mxu0 %v143
  %v723 = vpop.f32.mrf.mxu0
  %v724 = vadd.f32 %v675, %v723
  %v725 = vpop.f32.mrf.mxu0
  %v726 = vadd.f32 %v677, %v725
  %727 = vmatmul.bf16.gmra.mxu0 %v150
  %v728 = vpop.f32.mrf.mxu0
  %v729 = vadd.f32 %v680, %v728
  %v730 = vpop.f32.mrf.mxu0
  %v731 = vadd.f32 %v682, %v730
  %732 = vmatmul.bf16.gmra.mxu0 %v157
  %v733 = vpop.f32.mrf.mxu0
  %v734 = vadd.f32 %v685, %v733
  %v735 = vpop.f32.mrf.mxu0
  %v736 = vadd.f32 %v687, %v735
  %737 = vmatmul.bf16.gmra.mxu0 %v164
  %v738 = vpop.f32.mrf.mxu0
  %v739 = vadd.f32 %v690, %v738
  %v740 = vpop.f32.mrf.mxu0
  %v741 = vadd.f32 %v692, %v740
  %742 = vmatmul.bf16.gmra.mxu0 %v171
  %v743 = vpop.f32.mrf.mxu0
  %v744 = vadd.f32 %v695, %v743
  %v745 = vpop.f32.mrf.mxu0
  %v746 = vadd.f32 %v697, %v745
  %747 = vmatmul.bf16.gmra.mxu0 %v178
  %v748 = vpop.f32.mrf.mxu0
  %v749 = vadd.f32 %v700, %v748
  %v750 = vpop.f32.mrf.mxu0
  %v751 = vadd.f32 %v702, %v750
  %752 = vmatmul.bf16.gmra.mxu0 %v185
  %v753 = vpop.f32.mrf.mxu0
  %v754 = vadd.f32 %v705, %v753
  %v755 = vpop.f32.mrf.mxu0
  %v756 = vadd.f32 %v707, %v755
  %757 = vdwg.mxu0
  %758 = vmatpush.bf16.msra.mxu0 %v519
  %759 = vmatpush.bf16.msra.mxu0 %v518
  %760 = vmatpush.bf16.msra.mxu0 %v517
  %761 = vmatpush.bf16.msra.mxu0 %v516
  %762 = vmatpush.bf16.msra.mxu0 %v515
  %763 = vmatpush.bf16.msra.mxu0 %v514
  %764 = vmatpush.bf16.msra.mxu0 %v513
  %765 = vmatpush.bf16.msra.mxu0 %v512
  %766 = vmatmul.bf16.gmra.mxu0 %v137
  %v767 = vpop.f32.mrf.mxu0
  %v768 = vadd.f32 %v719, %v767
  %v769 = vpop.f32.mrf.mxu0
  %v770 = vadd.f32 %v721, %v769
  %771 = vmatmul.bf16.gmra.mxu0 %v144
  %v772 = vpop.f32.mrf.mxu0
  %v773 = vadd.f32 %v724, %v772
  %v774 = vpop.f32.mrf.mxu0
  %v775 = vadd.f32 %v726, %v774
  %776 = vmatmul.bf16.gmra.mxu0 %v151
  %v777 = vpop.f32.mrf.mxu0
  %v778 = vadd.f32 %v729, %v777
  %v779 = vpop.f32.mrf.mxu0
  %v780 = vadd.f32 %v731, %v779
  %781 = vmatmul.bf16.gmra.mxu0 %v158
  %v782 = vpop.f32.mrf.mxu0
  %v783 = vadd.f32 %v734, %v782
  %v784 = vpop.f32.mrf.mxu0
  %v785 = vadd.f32 %v736, %v784
  %786 = vmatmul.bf16.gmra.mxu0 %v165
  %v787 = vpop.f32.mrf.mxu0
  %v788 = vadd.f32 %v739, %v787
  %v789 = vpop.f32.mrf.mxu0
  %v790 = vadd.f32 %v741, %v789
  %791 = vmatmul.bf16.gmra.mxu0 %v172
  %v792 = vpop.f32.mrf.mxu0
  %v793 = vadd.f32 %v744, %v792
  %v794 = vpop.f32.mrf.mxu0
  %v795 = vadd.f32 %v746, %v794
  %796 = vmatmul.bf16.gmra.mxu0 %v179
  %v797 = vpop.f32.mrf.mxu0
  %v798 = vadd.f32 %v749, %v797
  %v799 = vpop.f32.mrf.mxu0
  %v800 = vadd.f32 %v751, %v799
  %801 = vmatmul.bf16.gmra.mxu0 %v186
  %v802 = vpop.f32.mrf.mxu0
  %v803 = vadd.f32 %v754, %v802
  %v804 = vpop.f32.mrf.mxu0
  %v805 = vadd.f32 %v756, %v804
  %806 = vdwg.mxu0
  %807 = vmatpush.bf16.msra.mxu0 %v527
  %808 = vmatpush.bf16.msra.mxu0 %v526
  %809 = vmatpush.bf16.msra.mxu0 %v525
  %810 = vmatpush.bf16.msra.mxu0 %v524
  %811 = vmatpush.bf16.msra.mxu0 %v523
  %812 = vmatpush.bf16.msra.mxu0 %v522
  %813 = vmatpush.bf16.msra.mxu0 %v521
  %814 = vmatpush.bf16.msra.mxu0 %v520
  %815 = vmatmul.bf16.gmra.mxu0 %v138
  %v816 = vpop.f32.mrf.mxu0
  %v817 = vadd.f32 %v768, %v816
  %v818 = vpop.f32.mrf.mxu0
  %v819 = vadd.f32 %v770, %v818
  %820 = vmatmul.bf16.gmra.mxu0 %v145
  %v821 = vpop.f32.mrf.mxu0
  %v822 = vadd.f32 %v773, %v821
  %v823 = vpop.f32.mrf.mxu0
  %v824 = vadd.f32 %v775, %v823
  %825 = vmatmul.bf16.gmra.mxu0 %v152
  %v826 = vpop.f32.mrf.mxu0
  %v827 = vadd.f32 %v778, %v826
  %v828 = vpop.f32.mrf.mxu0
  %v829 = vadd.f32 %v780, %v828
  %830 = vmatmul.bf16.gmra.mxu0 %v159
  %v831 = vpop.f32.mrf.mxu0
  %v832 = vadd.f32 %v783, %v831
  %v833 = vpop.f32.mrf.mxu0
  %v834 = vadd.f32 %v785, %v833
  %835 = vmatmul.bf16.gmra.mxu0 %v166
  %v836 = vpop.f32.mrf.mxu0
  %v837 = vadd.f32 %v788, %v836
  %v838 = vpop.f32.mrf.mxu0
  %v839 = vadd.f32 %v790, %v838
  %840 = vmatmul.bf16.gmra.mxu0 %v173
  %v841 = vpop.f32.mrf.mxu0
  %v842 = vadd.f32 %v793, %v841
  %v843 = vpop.f32.mrf.mxu0
  %v844 = vadd.f32 %v795, %v843
  %845 = vmatmul.bf16.gmra.mxu0 %v180
  %v846 = vpop.f32.mrf.mxu0
  %v847 = vadd.f32 %v798, %v846
  %v848 = vpop.f32.mrf.mxu0
  %v849 = vadd.f32 %v800, %v848
  %850 = vmatmul.bf16.gmra.mxu0 %v187
  %v851 = vpop.f32.mrf.mxu0
  %v852 = vadd.f32 %v803, %v851
  %v853 = vpop.f32.mrf.mxu0
  %v854 = vadd.f32 %v805, %v853
  %855 = vdwg.mxu0
  %856 = vmatpush.bf16.msra.mxu0 %v535
  %857 = vmatpush.bf16.msra.mxu0 %v534
  %858 = vmatpush.bf16.msra.mxu0 %v533
  %859 = vmatpush.bf16.msra.mxu0 %v532
  %860 = vmatpush.bf16.msra.mxu0 %v531
  %861 = vmatpush.bf16.msra.mxu0 %v530
  %862 = vmatpush.bf16.msra.mxu0 %v529
  %863 = vmatpush.bf16.msra.mxu0 %v528
  %864 = vmatmul.bf16.gmra.mxu0 %v139
  %v865 = vpop.f32.mrf.mxu0
  %v866 = vadd.f32 %v817, %v865
  %v867 = vpop.f32.mrf.mxu0
  %v868 = vadd.f32 %v819, %v867
  %869 = vmatmul.bf16.gmra.mxu0 %v146
  %v870 = vpop.f32.mrf.mxu0
  %v871 = vadd.f32 %v822, %v870
  %v872 = vpop.f32.mrf.mxu0
  %v873 = vadd.f32 %v824, %v872
  %874 = vmatmul.bf16.gmra.mxu0 %v153
  %v875 = vpop.f32.mrf.mxu0
  %v876 = vadd.f32 %v827, %v875
  %v877 = vpop.f32.mrf.mxu0
  %v878 = vadd.f32 %v829, %v877
  %879 = vmatmul.bf16.gmra.mxu0 %v160
  %v880 = vpop.f32.mrf.mxu0
  %v881 = vadd.f32 %v832, %v880
  %v882 = vpop.f32.mrf.mxu0
  %v883 = vadd.f32 %v834, %v882
  %884 = vmatmul.bf16.gmra.mxu0 %v167
  %v885 = vpop.f32.mrf.mxu0
  %v886 = vadd.f32 %v837, %v885
  %v887 = vpop.f32.mrf.mxu0
  %v888 = vadd.f32 %v839, %v887
  %889 = vmatmul.bf16.gmra.mxu0 %v174
  %v890 = vpop.f32.mrf.mxu0
  %v891 = vadd.f32 %v842, %v890
  %v892 = vpop.f32.mrf.mxu0
  %v893 = vadd.f32 %v844, %v892
  %894 = vmatmul.bf16.gmra.mxu0 %v181
  %v895 = vpop.f32.mrf.mxu0
  %v896 = vadd.f32 %v847, %v895
  %v897 = vpop.f32.mrf.mxu0
  %v898 = vadd.f32 %v849, %v897
  %899 = vmatmul.bf16.gmra.mxu0 %v188
  %v900 = vpop.f32.mrf.mxu0
  %v901 = vadd.f32 %v852, %v900
  %v902 = vpop.f32.mrf.mxu0
  %v903 = vadd.f32 %v854, %v902
  %904 = vdwg.mxu0
  %905 = vmatpush.bf16.msra.mxu0 0
  %906 = vmatpush.bf16.msra.mxu0 0
  %907 = vmatpush.bf16.msra.mxu0 0
  %908 = vmatpush.bf16.msra.mxu0 0
  %909 = vmatpush.bf16.msra.mxu0 0
  %910 = vmatpush.bf16.msra.mxu0 0
  %911 = vmatpush.bf16.msra.mxu0 0
  %912 = vmatpush.bf16.msra.mxu0 %v536
  %913 = vmatmul.bf16.gmra.mxu0 %v588
  %v914 = vpop.f32.mrf.mxu0
  %v915 = vadd.f32 %v866, %v914
  %v916 = vpop.f32.mrf.mxu0
  %v917 = vadd.f32 %v868, %v916
  %918 = vmatmul.bf16.gmra.mxu0 %v591
  %v919 = vpop.f32.mrf.mxu0
  %v920 = vadd.f32 %v871, %v919
  %v921 = vpop.f32.mrf.mxu0
  %v922 = vadd.f32 %v873, %v921
  %923 = vmatmul.bf16.gmra.mxu0 %v594
  %v924 = vpop.f32.mrf.mxu0
  %v925 = vadd.f32 %v876, %v924
  %v926 = vpop.f32.mrf.mxu0
  %v927 = vadd.f32 %v878, %v926
  %928 = vmatmul.bf16.gmra.mxu0 %v597
  %v929 = vpop.f32.mrf.mxu0
  %v930 = vadd.f32 %v881, %v929
  %v931 = vpop.f32.mrf.mxu0
  %v932 = vadd.f32 %v883, %v931
  %933 = vmatmul.bf16.gmra.mxu0 %v600
  %v934 = vpop.f32.mrf.mxu0
  %v935 = vadd.f32 %v886, %v934
  %v936 = vpop.f32.mrf.mxu0
  %v937 = vadd.f32 %v888, %v936
  %938 = vmatmul.bf16.gmra.mxu0 %v603
  %v939 = vpop.f32.mrf.mxu0
  %v940 = vadd.f32 %v891, %v939
  %v941 = vpop.f32.mrf.mxu0
  %v942 = vadd.f32 %v893, %v941
  %943 = vmatmul.bf16.gmra.mxu0 %v606
  %v944 = vpop.f32.mrf.mxu0
  %v945 = vadd.f32 %v896, %v944
  %v946 = vpop.f32.mrf.mxu0
  %v947 = vadd.f32 %v898, %v946
  %948 = vmatmul.bf16.gmra.mxu0 %v609
  %v949 = vpop.f32.mrf.mxu0
  %v950 = vadd.f32 %v901, %v949
  %v951 = vpop.f32.mrf.mxu0
  %v952 = vadd.f32 %v903, %v951
  %953 = vdwg.mxu0
  %v954 = vmul.f32 %v915, 0.2
  %v955 = vmul.f32 %v917, 0.2
  %v956 = vmul.f32 %v920, 0.2
  %v957 = vmul.f32 %v922, 0.2
  %v958 = vmul.f32 %v925, 0.2
  %v959 = vmul.f32 %v927, 0.2
  %v960 = vmul.f32 %v930, 0.2
  %v961 = vmul.f32 %v932, 0.2
  %v962 = vmul.f32 %v935, 0.2
  %v963 = vmul.f32 %v937, 0.2
  %v964 = vmul.f32 %v940, 0.2
  %v965 = vmul.f32 %v942, 0.2
  %v966 = vmul.f32 %v945, 0.2
  %v967 = vmul.f32 %v947, 0.2
  %v968 = vmul.f32 %v950, 0.2
  %v969 = vmul.f32 %v952, 0.2
  %v970 = vmax.f32 %v915, %v954
  %v971 = vmax.f32 %v917, %v955
  %v972 = vmax.f32 %v920, %v956
  %v973 = vmax.f32 %v922, %v957
  %v974 = vmax.f32 %v925, %v958
  %v975 = vmax.f32 %v927, %v959
  %v976 = vmax.f32 %v930, %v960
  %v977 = vmax.f32 %v932, %v961
  %v978 = vmax.f32 %v935, %v962
  %v979 = vmax.f32 %v937, %v963
  %v980 = vmax.f32 %v940, %v964
  %v981 = vmax.f32 %v942, %v965
  %v982 = vmax.f32 %v945, %v966
  %v983 = vmax.f32 %v947, %v967
  %v984 = vmax.f32 %v950, %v968
  %v985 = vmax.f32 %v952, %v969
  %v986 = vld [vmem:[%s3] sm:$0x1]
  %v988 = vperm.slane %v986, 0
  %v990 = vmul.f32 %v970, %v988
  %v991 = vmul.f32 %v971, %v988
  %v992 = vmul.f32 %v972, %v988
  %v993 = vmul.f32 %v973, %v988
  %v994 = vmul.f32 %v974, %v988
  %v995 = vmul.f32 %v975, %v988
  %v996 = vmul.f32 %v976, %v988
  %v997 = vmul.f32 %v977, %v988
  %v998 = vmul.f32 %v978, %v988
  %v999 = vmul.f32 %v979, %v988
  %v1000 = vmul.f32 %v980, %v988
  %v1001 = vmul.f32 %v981, %v988
  %v1002 = vmul.f32 %v982, %v988
  %v1003 = vmul.f32 %v983, %v988
  %v1004 = vmul.f32 %v984, %v988
  %v1005 = vmul.f32 %v985, %v988
  %1006 = vadd.xlane.f32.xlu0 %v990
  %v1007 = vpop.xlane.xlu0 %1006
  %1008 = vadd.xlane.f32.xlu0 %v991
  %v1009 = vpop.xlane.xlu0 %1008
  %1010 = vadd.xlane.f32.xlu0 %v992
  %v1011 = vpop.xlane.xlu0 %1010
  %1012 = vadd.xlane.f32.xlu0 %v993
  %v1013 = vpop.xlane.xlu0 %1012
  %1014 = vadd.xlane.f32.xlu0 %v994
  %v1015 = vpop.xlane.xlu0 %1014
  %1016 = vadd.xlane.f32.xlu0 %v995
  %v1017 = vpop.xlane.xlu0 %1016
  %1018 = vadd.xlane.f32.xlu0 %v996
  %v1019 = vpop.xlane.xlu0 %1018
  %1020 = vadd.xlane.f32.xlu0 %v997
  %v1021 = vpop.xlane.xlu0 %1020
  %1022 = vadd.xlane.f32.xlu0 %v998
  %v1023 = vpop.xlane.xlu0 %1022
  %1024 = vadd.xlane.f32.xlu0 %v999
  %v1025 = vpop.xlane.xlu0 %1024
  %1026 = vadd.xlane.f32.xlu0 %v1000
  %v1027 = vpop.xlane.xlu0 %1026
  %1028 = vadd.xlane.f32.xlu0 %v1001
  %v1029 = vpop.xlane.xlu0 %1028
  %1030 = vadd.xlane.f32.xlu0 %v1002
  %v1031 = vpop.xlane.xlu0 %1030
  %1032 = vadd.xlane.f32.xlu0 %v1003
  %v1033 = vpop.xlane.xlu0 %1032
  %1034 = vadd.xlane.f32.xlu0 %v1004
  %v1035 = vpop.xlane.xlu0 %1034
  %1036 = vadd.xlane.f32.xlu0 %v1005
  %v1037 = vpop.xlane.xlu0 %1036
  %s1038 = sld [smem:[#allocation2]]
  %v1039 = vstv %s1038
  %v1040 = vadd.f32 %v1007, %v1039
  %v1041 = vadd.f32 %v1009, %v1039
  %v1042 = vadd.f32 %v1011, %v1039
  %v1043 = vadd.f32 %v1013, %v1039
  %v1044 = vadd.f32 %v1015, %v1039
  %v1045 = vadd.f32 %v1017, %v1039
  %v1046 = vadd.f32 %v1019, %v1039
  %v1047 = vadd.f32 %v1021, %v1039
  %v1048 = vadd.f32 %v1023, %v1039
  %v1049 = vadd.f32 %v1025, %v1039
  %v1050 = vadd.f32 %v1027, %v1039
  %v1051 = vadd.f32 %v1029, %v1039
  %v1052 = vadd.f32 %v1031, %v1039
  %v1053 = vadd.f32 %v1033, %v1039
  %v1054 = vadd.f32 %v1035, %v1039
  %v1055 = vadd.f32 %v1037, %v1039
  %v1056 = vsub.f32 0.0, %v1040
  %v1057 = vsub.f32 0.0, %v1041
  %v1058 = vsub.f32 0.0, %v1042
  %v1059 = vsub.f32 0.0, %v1043
  %v1060 = vsub.f32 0.0, %v1044
  %v1061 = vsub.f32 0.0, %v1045
  %v1062 = vsub.f32 0.0, %v1046
  %v1063 = vsub.f32 0.0, %v1047
  %v1064 = vsub.f32 0.0, %v1048
  %v1065 = vsub.f32 0.0, %v1049
  %v1066 = vsub.f32 0.0, %v1050
  %v1067 = vsub.f32 0.0, %v1051
  %v1068 = vsub.f32 0.0, %v1052
  %v1069 = vsub.f32 0.0, %v1053
  %v1070 = vsub.f32 0.0, %v1054
  %v1071 = vsub.f32 0.0, %v1055
  %v1072 = vmul.f32 %v1056, 1.442695
  %v1073 = vpow.pop %v1072
  %v1074 = vmul.f32 %v1057, 1.442695
  %v1075 = vpow.pop %v1074
  %v1076 = vmul.f32 %v1058, 1.442695
  %v1077 = vpow.pop %v1076
  %v1078 = vmul.f32 %v1059, 1.442695
  %v1079 = vpow.pop %v1078
  %v1080 = vmul.f32 %v1060, 1.442695
  %v1081 = vpow.pop %v1080
  %v1082 = vmul.f32 %v1061, 1.442695
  %v1083 = vpow.pop %v1082
  %v1084 = vmul.f32 %v1062, 1.442695
  %v1085 = vpow.pop %v1084
  %v1086 = vmul.f32 %v1063, 1.442695
  %v1087 = vpow.pop %v1086
  %v1088 = vmul.f32 %v1064, 1.442695
  %v1089 = vpow.pop %v1088
  %v1090 = vmul.f32 %v1065, 1.442695
  %v1091 = vpow.pop %v1090
  %v1092 = vmul.f32 %v1066, 1.442695
  %v1093 = vpow.pop %v1092
  %v1094 = vmul.f32 %v1067, 1.442695
  %v1095 = vpow.pop %v1094
  %v1096 = vmul.f32 %v1068, 1.442695
  %v1097 = vpow.pop %v1096
  %v1098 = vmul.f32 %v1069, 1.442695
  %v1099 = vpow.pop %v1098
  %v1100 = vmul.f32 %v1070, 1.442695
  %v1101 = vpow.pop %v1100
  %v1102 = vmul.f32 %v1071, 1.442695
  %v1103 = vpow.pop %v1102
  %v1104 = vadd.f32 %v1073, 1.0
  %v1105 = vadd.f32 %v1075, 1.0
  %v1106 = vadd.f32 %v1077, 1.0
  %v1107 = vadd.f32 %v1079, 1.0
  %v1108 = vadd.f32 %v1081, 1.0
  %v1109 = vadd.f32 %v1083, 1.0
  %v1110 = vadd.f32 %v1085, 1.0
  %v1111 = vadd.f32 %v1087, 1.0
  %v1112 = vadd.f32 %v1089, 1.0
  %v1113 = vadd.f32 %v1091, 1.0
  %v1114 = vadd.f32 %v1093, 1.0
  %v1115 = vadd.f32 %v1095, 1.0
  %v1116 = vadd.f32 %v1097, 1.0
  %v1117 = vadd.f32 %v1099, 1.0
  %v1118 = vadd.f32 %v1101, 1.0
  %v1119 = vadd.f32 %v1103, 1.0
  %v1120 = vrcp.pop %v1104
  %v1121 = vmul.f32 %v1104, %v1120
  %v1122 = vsub.f32 1.0, %v1121
  %v1123 = vmul.f32 %v1120, %v1122
  %v1124 = vadd.f32 %v1120, %v1123
  %vm1125 = vweird.f32 %v1104
  %vm1126 = vweird.f32 %v1120
  %vm1127 = vmor %vm1125, %vm1126
  %v1128 = vsel %vm1127, %v1120, %v1124
  %v1129 = vand.u32 2147483647, %v1104
  %vm1130 = vcmp.eq.f32.partialorder %v1129, 8.507059e+37
  %v1131 = vand.u32 %v1104, 2147483648
  %v1132 = vor.u32 1.1754944e-38, %v1131
  %v1133 = vsel %vm1130, %v1132, %v1128
  %v1134 = vrcp.pop %v1105
  %v1135 = vmul.f32 %v1105, %v1134
  %v1136 = vsub.f32 1.0, %v1135
  %v1137 = vmul.f32 %v1134, %v1136
  %v1138 = vadd.f32 %v1134, %v1137
  %vm1139 = vweird.f32 %v1105
  %vm1140 = vweird.f32 %v1134
  %vm1141 = vmor %vm1139, %vm1140
  %v1142 = vsel %vm1141, %v1134, %v1138
  %v1143 = vand.u32 2147483647, %v1105
  %vm1144 = vcmp.eq.f32.partialorder %v1143, 8.507059e+37
  %v1145 = vand.u32 %v1105, 2147483648
  %v1146 = vor.u32 1.1754944e-38, %v1145
  %v1147 = vsel %vm1144, %v1146, %v1142
  %v1148 = vrcp.pop %v1106
  %v1149 = vmul.f32 %v1106, %v1148
  %v1150 = vsub.f32 1.0, %v1149
  %v1151 = vmul.f32 %v1148, %v1150
  %v1152 = vadd.f32 %v1148, %v1151
  %vm1153 = vweird.f32 %v1106
  %vm1154 = vweird.f32 %v1148
  %vm1155 = vmor %vm1153, %vm1154
  %v1156 = vsel %vm1155, %v1148, %v1152
  %v1157 = vand.u32 2147483647, %v1106
  %vm1158 = vcmp.eq.f32.partialorder %v1157, 8.507059e+37
  %v1159 = vand.u32 %v1106, 2147483648
  %v1160 = vor.u32 1.1754944e-38, %v1159
  %v1161 = vsel %vm1158, %v1160, %v1156
  %v1162 = vrcp.pop %v1107
  %v1163 = vmul.f32 %v1107, %v1162
  %v1164 = vsub.f32 1.0, %v1163
  %v1165 = vmul.f32 %v1162, %v1164
  %v1166 = vadd.f32 %v1162, %v1165
  %vm1167 = vweird.f32 %v1107
  %vm1168 = vweird.f32 %v1162
  %vm1169 = vmor %vm1167, %vm1168
  %v1170 = vsel %vm1169, %v1162, %v1166
  %v1171 = vand.u32 2147483647, %v1107
  %vm1172 = vcmp.eq.f32.partialorder %v1171, 8.507059e+37
  %v1173 = vand.u32 %v1107, 2147483648
  %v1174 = vor.u32 1.1754944e-38, %v1173
  %v1175 = vsel %vm1172, %v1174, %v1170
  %v1176 = vrcp.pop %v1108
  %v1177 = vmul.f32 %v1108, %v1176
  %v1178 = vsub.f32 1.0, %v1177
  %v1179 = vmul.f32 %v1176, %v1178
  %v1180 = vadd.f32 %v1176, %v1179
  %vm1181 = vweird.f32 %v1108
  %vm1182 = vweird.f32 %v1176
  %vm1183 = vmor %vm1181, %vm1182
  %v1184 = vsel %vm1183, %v1176, %v1180
  %v1185 = vand.u32 2147483647, %v1108
  %vm1186 = vcmp.eq.f32.partialorder %v1185, 8.507059e+37
  %v1187 = vand.u32 %v1108, 2147483648
  %v1188 = vor.u32 1.1754944e-38, %v1187
  %v1189 = vsel %vm1186, %v1188, %v1184
  %v1190 = vrcp.pop %v1109
  %v1191 = vmul.f32 %v1109, %v1190
  %v1192 = vsub.f32 1.0, %v1191
  %v1193 = vmul.f32 %v1190, %v1192
  %v1194 = vadd.f32 %v1190, %v1193
  %vm1195 = vweird.f32 %v1109
  %vm1196 = vweird.f32 %v1190
  %vm1197 = vmor %vm1195, %vm1196
  %v1198 = vsel %vm1197, %v1190, %v1194
  %v1199 = vand.u32 2147483647, %v1109
  %vm1200 = vcmp.eq.f32.partialorder %v1199, 8.507059e+37
  %v1201 = vand.u32 %v1109, 2147483648
  %v1202 = vor.u32 1.1754944e-38, %v1201
  %v1203 = vsel %vm1200, %v1202, %v1198
  %v1204 = vrcp.pop %v1110
  %v1205 = vmul.f32 %v1110, %v1204
  %v1206 = vsub.f32 1.0, %v1205
  %v1207 = vmul.f32 %v1204, %v1206
  %v1208 = vadd.f32 %v1204, %v1207
  %vm1209 = vweird.f32 %v1110
  %vm1210 = vweird.f32 %v1204
  %vm1211 = vmor %vm1209, %vm1210
  %v1212 = vsel %vm1211, %v1204, %v1208
  %v1213 = vand.u32 2147483647, %v1110
  %vm1214 = vcmp.eq.f32.partialorder %v1213, 8.507059e+37
  %v1215 = vand.u32 %v1110, 2147483648
  %v1216 = vor.u32 1.1754944e-38, %v1215
  %v1217 = vsel %vm1214, %v1216, %v1212
  %v1218 = vrcp.pop %v1111
  %v1219 = vmul.f32 %v1111, %v1218
  %v1220 = vsub.f32 1.0, %v1219
  %v1221 = vmul.f32 %v1218, %v1220
  %v1222 = vadd.f32 %v1218, %v1221
  %vm1223 = vweird.f32 %v1111
  %vm1224 = vweird.f32 %v1218
  %vm1225 = vmor %vm1223, %vm1224
  %v1226 = vsel %vm1225, %v1218, %v1222
  %v1227 = vand.u32 2147483647, %v1111
  %vm1228 = vcmp.eq.f32.partialorder %v1227, 8.507059e+37
  %v1229 = vand.u32 %v1111, 2147483648
  %v1230 = vor.u32 1.1754944e-38, %v1229
  %v1231 = vsel %vm1228, %v1230, %v1226
  %v1232 = vrcp.pop %v1112
  %v1233 = vmul.f32 %v1112, %v1232
  %v1234 = vsub.f32 1.0, %v1233
  %v1235 = vmul.f32 %v1232, %v1234
  %v1236 = vadd.f32 %v1232, %v1235
  %vm1237 = vweird.f32 %v1112
  %vm1238 = vweird.f32 %v1232
  %vm1239 = vmor %vm1237, %vm1238
  %v1240 = vsel %vm1239, %v1232, %v1236
  %v1241 = vand.u32 2147483647, %v1112
  %vm1242 = vcmp.eq.f32.partialorder %v1241, 8.507059e+37
  %v1243 = vand.u32 %v1112, 2147483648
  %v1244 = vor.u32 1.1754944e-38, %v1243
  %v1245 = vsel %vm1242, %v1244, %v1240
  %v1246 = vrcp.pop %v1113
  %v1247 = vmul.f32 %v1113, %v1246
  %v1248 = vsub.f32 1.0, %v1247
  %v1249 = vmul.f32 %v1246, %v1248
  %v1250 = vadd.f32 %v1246, %v1249
  %vm1251 = vweird.f32 %v1113
  %vm1252 = vweird.f32 %v1246
  %vm1253 = vmor %vm1251, %vm1252
  %v1254 = vsel %vm1253, %v1246, %v1250
  %v1255 = vand.u32 2147483647, %v1113
  %vm1256 = vcmp.eq.f32.partialorder %v1255, 8.507059e+37
  %v1257 = vand.u32 %v1113, 2147483648
  %v1258 = vor.u32 1.1754944e-38, %v1257
  %v1259 = vsel %vm1256, %v1258, %v1254
  %v1260 = vrcp.pop %v1114
  %v1261 = vmul.f32 %v1114, %v1260
  %v1262 = vsub.f32 1.0, %v1261
  %v1263 = vmul.f32 %v1260, %v1262
  %v1264 = vadd.f32 %v1260, %v1263
  %vm1265 = vweird.f32 %v1114
  %vm1266 = vweird.f32 %v1260
  %vm1267 = vmor %vm1265, %vm1266
  %v1268 = vsel %vm1267, %v1260, %v1264
  %v1269 = vand.u32 2147483647, %v1114
  %vm1270 = vcmp.eq.f32.partialorder %v1269, 8.507059e+37
  %v1271 = vand.u32 %v1114, 2147483648
  %v1272 = vor.u32 1.1754944e-38, %v1271
  %v1273 = vsel %vm1270, %v1272, %v1268
  %v1274 = vrcp.pop %v1115
  %v1275 = vmul.f32 %v1115, %v1274
  %v1276 = vsub.f32 1.0, %v1275
  %v1277 = vmul.f32 %v1274, %v1276
  %v1278 = vadd.f32 %v1274, %v1277
  %vm1279 = vweird.f32 %v1115
  %vm1280 = vweird.f32 %v1274
  %vm1281 = vmor %vm1279, %vm1280
  %v1282 = vsel %vm1281, %v1274, %v1278
  %v1283 = vand.u32 2147483647, %v1115
  %vm1284 = vcmp.eq.f32.partialorder %v1283, 8.507059e+37
  %v1285 = vand.u32 %v1115, 2147483648
  %v1286 = vor.u32 1.1754944e-38, %v1285
  %v1287 = vsel %vm1284, %v1286, %v1282
  %v1288 = vrcp.pop %v1116
  %v1289 = vmul.f32 %v1116, %v1288
  %v1290 = vsub.f32 1.0, %v1289
  %v1291 = vmul.f32 %v1288, %v1290
  %v1292 = vadd.f32 %v1288, %v1291
  %vm1293 = vweird.f32 %v1116
  %vm1294 = vweird.f32 %v1288
  %vm1295 = vmor %vm1293, %vm1294
  %v1296 = vsel %vm1295, %v1288, %v1292
  %v1297 = vand.u32 2147483647, %v1116
  %vm1298 = vcmp.eq.f32.partialorder %v1297, 8.507059e+37
  %v1299 = vand.u32 %v1116, 2147483648
  %v1300 = vor.u32 1.1754944e-38, %v1299
  %v1301 = vsel %vm1298, %v1300, %v1296
  %v1302 = vrcp.pop %v1117
  %v1303 = vmul.f32 %v1117, %v1302
  %v1304 = vsub.f32 1.0, %v1303
  %v1305 = vmul.f32 %v1302, %v1304
  %v1306 = vadd.f32 %v1302, %v1305
  %vm1307 = vweird.f32 %v1117
  %vm1308 = vweird.f32 %v1302
  %vm1309 = vmor %vm1307, %vm1308
  %v1310 = vsel %vm1309, %v1302, %v1306
  %v1311 = vand.u32 2147483647, %v1117
  %vm1312 = vcmp.eq.f32.partialorder %v1311, 8.507059e+37
  %v1313 = vand.u32 %v1117, 2147483648
  %v1314 = vor.u32 1.1754944e-38, %v1313
  %v1315 = vsel %vm1312, %v1314, %v1310
  %v1316 = vrcp.pop %v1118
  %v1317 = vmul.f32 %v1118, %v1316
  %v1318 = vsub.f32 1.0, %v1317
  %v1319 = vmul.f32 %v1316, %v1318
  %v1320 = vadd.f32 %v1316, %v1319
  %vm1321 = vweird.f32 %v1118
  %vm1322 = vweird.f32 %v1316
  %vm1323 = vmor %vm1321, %vm1322
  %v1324 = vsel %vm1323, %v1316, %v1320
  %v1325 = vand.u32 2147483647, %v1118
  %vm1326 = vcmp.eq.f32.partialorder %v1325, 8.507059e+37
  %v1327 = vand.u32 %v1118, 2147483648
  %v1328 = vor.u32 1.1754944e-38, %v1327
  %v1329 = vsel %vm1326, %v1328, %v1324
  %v1330 = vrcp.pop %v1119
  %v1331 = vmul.f32 %v1119, %v1330
  %v1332 = vsub.f32 1.0, %v1331
  %v1333 = vmul.f32 %v1330, %v1332
  %v1334 = vadd.f32 %v1330, %v1333
  %vm1335 = vweird.f32 %v1119
  %vm1336 = vweird.f32 %v1330
  %vm1337 = vmor %vm1335, %vm1336
  %v1338 = vsel %vm1337, %v1330, %v1334
  %v1339 = vand.u32 2147483647, %v1119
  %vm1340 = vcmp.eq.f32.partialorder %v1339, 8.507059e+37
  %v1341 = vand.u32 %v1119, 2147483648
  %v1342 = vor.u32 1.1754944e-38, %v1341
  %v1343 = vsel %vm1340, %v1342, %v1338
  %v1360 = vlaneseq
  %v1361 = vand.u32 %v1360, 127
  %v1362 = vperm.slane %v1133, %v1361
  %v1363 = vadd.s32 %v1361, 4294967288
  %v1364 = vperm.slane %v1147, %v1363
  %vm1365 = vcmask 130112
  %v1366 = vsel %vm1365, %v1364, %v1362
  %v1367 = vadd.s32 %v1361, 4294967280
  %v1368 = vperm.slane %v1161, %v1367
  %vm1369 = vcmask 195712
  %v1370 = vsel %vm1369, %v1368, %v1366
  %v1371 = vadd.s32 %v1361, 4294967272
  %v1372 = vperm.slane %v1175, %v1371
  %vm1373 = vcmask 261312
  %v1374 = vsel %vm1373, %v1372, %v1370
  %v1375 = vadd.s32 %v1361, 4294967264
  %v1376 = vperm.slane %v1189, %v1375
  %vm1377 = vcmask 326912
  %v1378 = vsel %vm1377, %v1376, %v1374
  %v1379 = vadd.s32 %v1361, 4294967256
  %v1380 = vperm.slane %v1203, %v1379
  %vm1381 = vcmask 392512
  %v1382 = vsel %vm1381, %v1380, %v1378
  %v1383 = vadd.s32 %v1361, 4294967248
  %v1384 = vperm.slane %v1217, %v1383
  %vm1385 = vcmask 458112
  %v1386 = vsel %vm1385, %v1384, %v1382
  %v1387 = vadd.s32 %v1361, 4294967240
  %v1388 = vperm.slane %v1231, %v1387
  %vm1389 = vcmask 523712
  %v1390 = vsel %vm1389, %v1388, %v1386
  %v1391 = vadd.s32 %v1361, 4294967232
  %v1392 = vperm.slane %v1245, %v1391
  %vm1393 = vcmask 589312
  %v1394 = vsel %vm1393, %v1392, %v1390
  %v1395 = vadd.s32 %v1361, 4294967224
  %v1396 = vperm.slane %v1259, %v1395
  %vm1397 = vcmask 654912
  %v1398 = vsel %vm1397, %v1396, %v1394
  %v1399 = vadd.s32 %v1361, 4294967216
  %v1400 = vperm.slane %v1273, %v1399
  %vm1401 = vcmask 720512
  %v1402 = vsel %vm1401, %v1400, %v1398
  %v1403 = vadd.s32 %v1361, 4294967208
  %v1404 = vperm.slane %v1287, %v1403
  %vm1405 = vcmask 786112
  %v1406 = vsel %vm1405, %v1404, %v1402
  %v1407 = vadd.s32 %v1361, 4294967200
  %v1408 = vperm.slane %v1301, %v1407
  %vm1409 = vcmask 851712
  %v1410 = vsel %vm1409, %v1408, %v1406
  %v1411 = vadd.s32 %v1361, 4294967192
  %v1412 = vperm.slane %v1315, %v1411
  %vm1413 = vcmask 917312
  %v1414 = vsel %vm1413, %v1412, %v1410
  %v1415 = vadd.s32 %v1361, 4294967184
  %v1416 = vperm.slane %v1329, %v1415
  %vm1417 = vcmask 982912
  %v1418 = vsel %vm1417, %v1416, %v1414
  %v1419 = vadd.s32 %v1361, 4294967176
  %v1420 = vperm.slane %v1343, %v1419
  %vm1421 = vcmask 1048512
  %v1422 = vsel %vm1421, %v1420, %v1418
  %1424 = vst [vmem:[%s5] sm:$0x1] %v1422
  // Predicated region
  $region22: #{dnet_forward.1} parent=0 // pred_check
    _
  $region23: #{dnet_forward.1} parent=0 // pred_check_branch
    %1426 = sbr.rel (0) target = $region25
  $region24: #{dnet_forward.1} parent=0 // pred_region
    _
  $region25: #{dnet_forward.1} parent=0 // pred_fallthru
    _
  // Predicated region
  $region26: #{dnet_forward.1} parent=0 // pred_check
    _
  $region27: #{dnet_forward.1} parent=0 // pred_check_branch
    %1428 = sbr.rel (0) target = $region29
  $region28: #{dnet_forward.1} parent=0 // pred_region
    _
  $region29: #{dnet_forward.1} parent=0 // pred_fallthru
    _

</llo_original>
